<compile_context>
chip_gen: v6e
topology: v6e:2x2x1
jax: 0.10.0
libtpu: 0.0.40
codegen_flags: <defaults>
</compile_context>

<pallas_src>
import functools

import jax
import jax.numpy as jnp
from jax.experimental import pallas as pl
from jax.experimental.pallas import tpu as pltpu

_LANE = 128          # vreg lane count (last dim)
_SUBLANE_BF16 = 16   # bf16 sublane tiling multiple (second-to-last dim)


def _round_up(x, m):
    return ((x + m - 1) // m) * m


def _cdiv(a, b):
    return -(-a // b)


def _mlp_kernel(n_layers, *refs):
    """refs = (x_ref, w0, b0, w1, b1, ..., wL-1, bL-1, o_ref).

    x_ref: (TB, IN) f32 or bf16 batch tile.
    w_l  : (in_p, out_p) bf16, VMEM-resident (lane-padded).
    b_l  : (1, out_p) f32.
    Computes relu(... relu(relu(x @ w0 + b0) @ w1 + b1) ... @ wL-1 + bL-1).
    """
    x_ref = refs[0]
    o_ref = refs[-1]
    param_refs = refs[1:-1]

    h = x_ref[...]
    for l in range(n_layers):                         # static unrolled loop
        w_ref = param_refs[2 * l]                     # bf16 (in_p, out_p)
        b_ref = param_refs[2 * l + 1]                 # f32  (1, out_p)
        # bf16 MXU operands, f32 accumulation.
        acc = jnp.dot(h.astype(jnp.bfloat16), w_ref[...],
                      preferred_element_type=jnp.float32)
        # bias add + ReLU in f32 (padded lanes stay exactly 0).
        h = jnp.maximum(acc + b_ref[...], 0.0)
    o_ref[...] = h.astype(o_ref.dtype)


def prepare_params(params, input_size):
    """One-time prep (hoisted out of the per-call path).

    Lane-pads every layer's output feature dim to a multiple of 128 and casts
    weights to bf16. Zero-padded weight rows/cols + zero bias + ReLU keep the
    padded lanes exactly zero, so results are unchanged.
    params: list of (W_t, b) with W_t (fan_in, fan_out) f32, b (1, fan_out) f32.
    """
    prepared = []
    prev_in_p = input_size            # input feature dim stays natural (full-dim block)
    for w_t, b in params:
        fi, fo = w_t.shape
        fo_p = _round_up(fo, _LANE)
        w_p = (jnp.zeros((prev_in_p, fo_p), jnp.float32)
               .at[:fi, :fo].set(w_t).astype(jnp.bfloat16))
        b_p = jnp.zeros((1, fo_p), jnp.float32).at[:, :fo].set(b)
        prepared.append((w_p, b_p))
        prev_in_p = fo_p
    return prepared


def mlp_forward(x, prepared_params, output_size, *, block_b=1024):
    """x: (B, input_size) f32 or bf16. prepared_params: from prepare_params().
    Returns (B, output_size) f32."""
    n_layers = len(prepared_params)
    B, in_dim = x.shape
    out_p = prepared_params[-1][0].shape[1]

    # ---- batch tiling ----------------------------------------------------
    # Large tiles amortize the ~0.35 us per-grid-step overhead. tb is sized so
    # remainder waste is < one sublane tile, and the grid is forced to >= 2
    # steps for non-trivial batches so "parallel" shards over both v7x TCs.
    n_steps = max(1, _cdiv(B, block_b))
    if n_steps == 1 and B > 2 * _SUBLANE_BF16:
        n_steps = 2
    tb = _round_up(_cdiv(B, n_steps), _SUBLANE_BF16)
    grid = (_cdiv(B, tb),)
    # No jnp.pad of x: the (possibly) partial last block is clipped/masked by
    # Pallas; OOB rows are row-independent and never written back since
    # out_shape keeps the natural batch size B.

    flat_params = []
    in_specs = [pl.BlockSpec((tb, in_dim), lambda i: (i, 0))]
    for w_p, b_p in prepared_params:
        flat_params.extend([w_p, b_p])
        # Grid-invariant weights/biases: index_map ignores the grid index ->
        # DMA'd once and kept VMEM-resident.
        in_specs.append(pl.BlockSpec(w_p.shape, lambda i: (0, 0)))
        in_specs.append(pl.BlockSpec(b_p.shape, lambda i: (0, 0)))
    out_specs = pl.BlockSpec((tb, out_p), lambda i: (i, 0))

    # Advisory cost estimate for the XLA scheduler.
    flops = 2 * B * sum(int(w.shape[0]) * int(w.shape[1])
                        for w, _ in prepared_params)
    bytes_accessed = (
        x.size * x.dtype.itemsize
        + sum(w.size * 2 + bb.size * 4 for w, bb in prepared_params)
        + B * out_p * 2)                              # bf16 output writeback
    cost = pl.CostEstimate(flops=flops, transcendentals=0,
                           bytes_accessed=bytes_accessed)

    # VMEM at tb=1024: x (1024,32)f32=128 KiB, out (1024,128)bf16=256 KiB
    # (double-buffered), params <0.2 MiB, f32 intermediates ~1.5 MiB -> well
    # under the scoped limit on every chip (incl. v7x), no override needed.
    kernel = functools.partial(_mlp_kernel, n_layers)
    out = pl.pallas_call(
        kernel,
        out_shape=jax.ShapeDtypeStruct((B, out_p), jnp.bfloat16),
        grid=grid,
        in_specs=in_specs,
        out_specs=out_specs,
        compiler_params=pltpu.CompilerParams(
            dimension_semantics=("parallel",)),
        cost_estimate=cost,
    )(x, *flat_params)

    # Slice off the lane padding and return f32 (matches the PyTorch module).
    return out[:, :output_size].astype(jnp.float32)


def make_params(key, input_size, layers, output_size):
    """Parameters matching the PyTorch module's Linear shapes.
    Returns list of (W_t, b): W_t is (fan_in, fan_out), b is (1, fan_out)."""
    dims = [input_size] + list(layers) + [output_size]
    params = []
    for fan_in, fan_out in zip(dims[:-1], dims[1:]):
        key, kw, kb = jax.random.split(key, 3)
        bound = 1.0 / (fan_in ** 0.5)
        w_t = jax.random.uniform(kw, (fan_in, fan_out), jnp.float32,
                                 minval=-bound, maxval=bound)
        b = jax.random.uniform(kb, (1, fan_out), jnp.float32,
                               minval=-bound, maxval=bound)
        params.append((w_t, b))
    return params


def mlp_reference_f32(x, params):
    h = x.astype(jnp.float32)
    for w_t, b in params:
        h = jnp.maximum(h @ w_t + b, 0.0)
    return h


def mlp_reference_bf16(x, params):
    """Same bf16-operand / f32-accumulate policy as the kernel, including the
    final bf16 writeback rounding."""
    h = x
    for w_t, b in params:
        acc = jnp.dot(h.astype(jnp.bfloat16), w_t.astype(jnp.bfloat16),
                      preferred_element_type=jnp.float32)
        h = jnp.maximum(acc + b, 0.0)
    return h.astype(jnp.bfloat16).astype(jnp.float32)


if __name__ == "__main__":
    key = jax.random.PRNGKey(0)

    # Small shapes consistent with MLP(input_size=32, layers=[64, 48], output_size=16).
    # batch=40 exercises both the two-step grid split and a partial last block.
    batch = 40
    input_size = 32
    layers = [64, 48]
    output_size = 16

    key, kx, kp = jax.random.split(key, 3)
    x = jax.random.normal(kx, (batch, input_size), jnp.float32)
    params = make_params(kp, input_size, layers, output_size)

    # One-time parameter prep (padding + bf16 cast hoisted out of the forward).
    prepared = prepare_params(params, input_size)

    fwd = jax.jit(lambda xx, pp: mlp_forward(xx, pp, output_size))

    out = jax.block_until_ready(fwd(x, prepared))
    assert out.shape == (batch, output_size)
    assert out.dtype == jnp.float32

    # Tight check vs a reference using the same bf16-matmul / bf16-writeback policy
    # (1e-2 tolerance absorbs a possible 1-ulp bf16 rounding-boundary flip).
    ref_bf16 = mlp_reference_bf16(x, params)
    assert jnp.allclose(out, ref_bf16, atol=1e-2, rtol=1e-2), \
        "mismatch vs bf16-matmul JAX reference"

    # Loose check vs the pure-f32 reference (bf16 operand + output rounding only).
    ref_f32 = mlp_reference_f32(x, params)
    assert jnp.allclose(out, ref_f32, atol=3e-2, rtol=3e-2), \
        "mismatch vs f32 JAX reference"

    # bf16-activation input path (first-layer cast becomes a no-op in-kernel);
    # result must match the f32-input path, which performs the same rounding.
    out_bf16_in = jax.block_until_ready(fwd(x.astype(jnp.bfloat16), prepared))
    assert jnp.allclose(out_bf16_in, out, atol=1e-5, rtol=1e-5), \
        "bf16-input path mismatch"

    print("KERNEL_OK")
</pallas_src>

<mosaic_0001>
module attributes {stable_mosaic.version = 11 : i64} {
  func.func @_mlp_kernel(%arg0: i32, %arg1: memref<32x32xf32, #tpu.memory_space<vmem>>, %arg2: memref<32x128xbf16, #tpu.memory_space<vmem>>, %arg3: memref<1x128xf32, #tpu.memory_space<vmem>>, %arg4: memref<128x128xbf16, #tpu.memory_space<vmem>>, %arg5: memref<1x128xf32, #tpu.memory_space<vmem>>, %arg6: memref<128x128xbf16, #tpu.memory_space<vmem>>, %arg7: memref<1x128xf32, #tpu.memory_space<vmem>>, %arg8: memref<32x128xbf16, #tpu.memory_space<vmem>>) attributes {dimension_semantics = [#tpu.dimension_semantics<parallel>], iteration_bounds = array<i64: 2>, scalar_prefetch = 0 : i64, scratch_operands = 0 : i64, tpu.core_type = #tpu.core_type<tc>, window_params = [{transform_indices = @transform_0, window_bounds = array<i64: 32, 32>}, {pipeline_mode = #tpu.pipeline_mode<synchronous>, transform_indices = @transform_1, window_bounds = array<i64: 32, 128>}, {pipeline_mode = #tpu.pipeline_mode<synchronous>, transform_indices = @transform_2, window_bounds = array<i64: 1, 128>}, {pipeline_mode = #tpu.pipeline_mode<synchronous>, transform_indices = @transform_3, window_bounds = array<i64: 128, 128>}, {pipeline_mode = #tpu.pipeline_mode<synchronous>, transform_indices = @transform_4, window_bounds = array<i64: 1, 128>}, {pipeline_mode = #tpu.pipeline_mode<synchronous>, transform_indices = @transform_5, window_bounds = array<i64: 128, 128>}, {pipeline_mode = #tpu.pipeline_mode<synchronous>, transform_indices = @transform_6, window_bounds = array<i64: 1, 128>}, {transform_indices = @transform_7, window_bounds = array<i64: 32, 128>}]} {
    %c0 = arith.constant 0 : index
    %c0_0 = arith.constant 0 : index
    %0 = vector.load %arg1[%c0, %c0_0] : memref<32x32xf32, #tpu.memory_space<vmem>>, vector<32x32xf32>
    %1 = arith.truncf %0 : vector<32x32xf32> to vector<32x32xbf16>
    %c0_1 = arith.constant 0 : index
    %c0_2 = arith.constant 0 : index
    %2 = vector.load %arg2[%c0_1, %c0_2] : memref<32x128xbf16, #tpu.memory_space<vmem>>, vector<32x128xbf16>
    %cst = arith.constant dense<0.000000e+00> : vector<32x128xf32>
    %3 = tpu.matmul %1, %2, %cst {dimension_numbers = #tpu.dot_dimension_numbers<[1], [0], [0], [1], [0, 0, 1, 1], [], []>} : vector<32x32xbf16>, vector<32x128xbf16>, vector<32x128xf32> -> vector<32x128xf32>
    %c0_3 = arith.constant 0 : index
    %c0_4 = arith.constant 0 : index
    %4 = vector.load %arg3[%c0_3, %c0_4] : memref<1x128xf32, #tpu.memory_space<vmem>>, vector<1x128xf32>
    %5 = vector.broadcast %4 : vector<1x128xf32> to vector<32x128xf32>
    %6 = arith.addf %3, %5 : vector<32x128xf32>
    %cst_5 = arith.constant 0.000000e+00 : f32
    %7 = vector.broadcast %cst_5 : f32 to vector<32x128xf32>
    %8 = arith.maximumf %6, %7 : vector<32x128xf32>
    %9 = arith.truncf %8 : vector<32x128xf32> to vector<32x128xbf16>
    %c0_6 = arith.constant 0 : index
    %c0_7 = arith.constant 0 : index
    %10 = vector.load %arg4[%c0_6, %c0_7] : memref<128x128xbf16, #tpu.memory_space<vmem>>, vector<128x128xbf16>
    %cst_8 = arith.constant dense<0.000000e+00> : vector<32x128xf32>
    %11 = tpu.matmul %9, %10, %cst_8 {dimension_numbers = #tpu.dot_dimension_numbers<[1], [0], [0], [1], [0, 0, 1, 1], [], []>} : vector<32x128xbf16>, vector<128x128xbf16>, vector<32x128xf32> -> vector<32x128xf32>
    %c0_9 = arith.constant 0 : index
    %c0_10 = arith.constant 0 : index
    %12 = vector.load %arg5[%c0_9, %c0_10] : memref<1x128xf32, #tpu.memory_space<vmem>>, vector<1x128xf32>
    %13 = vector.broadcast %12 : vector<1x128xf32> to vector<32x128xf32>
    %14 = arith.addf %11, %13 : vector<32x128xf32>
    %cst_11 = arith.constant 0.000000e+00 : f32
    %15 = vector.broadcast %cst_11 : f32 to vector<32x128xf32>
    %16 = arith.maximumf %14, %15 : vector<32x128xf32>
    %17 = arith.truncf %16 : vector<32x128xf32> to vector<32x128xbf16>
    %c0_12 = arith.constant 0 : index
    %c0_13 = arith.constant 0 : index
    %18 = vector.load %arg6[%c0_12, %c0_13] : memref<128x128xbf16, #tpu.memory_space<vmem>>, vector<128x128xbf16>
    %cst_14 = arith.constant dense<0.000000e+00> : vector<32x128xf32>
    %19 = tpu.matmul %17, %18, %cst_14 {dimension_numbers = #tpu.dot_dimension_numbers<[1], [0], [0], [1], [0, 0, 1, 1], [], []>} : vector<32x128xbf16>, vector<128x128xbf16>, vector<32x128xf32> -> vector<32x128xf32>
    %c0_15 = arith.constant 0 : index
    %c0_16 = arith.constant 0 : index
    %20 = vector.load %arg7[%c0_15, %c0_16] : memref<1x128xf32, #tpu.memory_space<vmem>>, vector<1x128xf32>
    %21 = vector.broadcast %20 : vector<1x128xf32> to vector<32x128xf32>
    %22 = arith.addf %19, %21 : vector<32x128xf32>
    %cst_17 = arith.constant 0.000000e+00 : f32
    %23 = vector.broadcast %cst_17 : f32 to vector<32x128xf32>
    %24 = arith.maximumf %22, %23 : vector<32x128xf32>
    %25 = arith.truncf %24 : vector<32x128xf32> to vector<32x128xbf16>
    %c0_18 = arith.constant 0 : index
    %c0_19 = arith.constant 0 : index
    %26 = vector.load %arg8[%c0_18, %c0_19] : memref<32x128xbf16, #tpu.memory_space<vmem>>, vector<32x128xbf16>
    tpu.vector_store %arg8[%c0_18, %c0_19], %25 {strides = array<i32>} : memref<32x128xbf16, #tpu.memory_space<vmem>>, vector<32x128xbf16>,
    return
  }
  func.func @transform_0(%arg0: i32) -> (i32, i32) {
    %c0_i32 = arith.constant 0 : i32
    %c0_i32_0 = arith.constant 0 : i32
    return %arg0, %c0_i32 : i32, i32
  }
  func.func @transform_1(%arg0: i32) -> (i32, i32) {
    %c0_i32 = arith.constant 0 : i32
    %c0_i32_0 = arith.constant 0 : i32
    %c0_i32_1 = arith.constant 0 : i32
    return %c0_i32, %c0_i32_0 : i32, i32
  }
  func.func @transform_2(%arg0: i32) -> (i32, i32) {
    %c0_i32 = arith.constant 0 : i32
    %c0_i32_0 = arith.constant 0 : i32
    %c0_i32_1 = arith.constant 0 : i32
    return %c0_i32, %c0_i32_0 : i32, i32
  }
  func.func @transform_3(%arg0: i32) -> (i32, i32) {
    %c0_i32 = arith.constant 0 : i32
    %c0_i32_0 = arith.constant 0 : i32
    %c0_i32_1 = arith.constant 0 : i32
    return %c0_i32, %c0_i32_0 : i32, i32
  }
  func.func @transform_4(%arg0: i32) -> (i32, i32) {
    %c0_i32 = arith.constant 0 : i32
    %c0_i32_0 = arith.constant 0 : i32
    %c0_i32_1 = arith.constant 0 : i32
    return %c0_i32, %c0_i32_0 : i32, i32
  }
  func.func @transform_5(%arg0: i32) -> (i32, i32) {
    %c0_i32 = arith.constant 0 : i32
    %c0_i32_0 = arith.constant 0 : i32
    %c0_i32_1 = arith.constant 0 : i32
    return %c0_i32, %c0_i32_0 : i32, i32
  }
  func.func @transform_6(%arg0: i32) -> (i32, i32) {
    %c0_i32 = arith.constant 0 : i32
    %c0_i32_0 = arith.constant 0 : i32
    %c0_i32_1 = arith.constant 0 : i32
    return %c0_i32, %c0_i32_0 : i32, i32
  }
  func.func @transform_7(%arg0: i32) -> (i32, i32) {
    %c0_i32 = arith.constant 0 : i32
    %c0_i32_0 = arith.constant 0 : i32
    return %arg0, %c0_i32 : i32, i32
  }
}

</mosaic_0001>

<llo_original>
// kernel: _lambda_.1
$region0: #{_lambda_.1}
  #allocation0 [shape = 'u32[]', space=smem, size = 0x4, offset = 0x4, fixed_abs, tag = 'smem constant byte address 0x4 - core index']
  #allocation1 [shape = 'u32[144,128]{1,0:T(1,128)}', space=vmem, size = 0x12000, scoped, tag = 'internal scratch']
  %s0 = inlined_call_operand.vmem [shape: f32[40,32], index: 0, kind: input, shape index: {}]
  %s1 = inlined_call_operand.hbm [shape: bf16[32,128], index: 1, kind: input, shape index: {}]
  %s2 = inlined_call_operand.vmem [shape: f32[1,128], index: 2, kind: input, shape index: {}]
  %s3 = inlined_call_operand.vmem [shape: bf16[128,128], index: 3, kind: input, shape index: {}]
  %s4 = inlined_call_operand.vmem [shape: f32[1,128], index: 4, kind: input, shape index: {}]
  %s5 = inlined_call_operand.hbm [shape: bf16[128,128], index: 5, kind: input, shape index: {}]
  %s6 = inlined_call_operand.vmem [shape: f32[1,128], index: 6, kind: input, shape index: {}]
  %s7 = inlined_call_operand.vmem [shape: bf16[40,128], index: 7, kind: output, shape index: {}]
  %s8 = sld [smem:[#allocation0]]
  $region113: #{_lambda_.1} parent=0
    _
  %s10 = ssub.s32 1, %s8
  %s11 = scalar_select 0, %s10, %s8
  $region1: #{_lambda_.1} parent=0
    #allocation2 [shape = 'u8[8192]{0}', space=vmem, size = 0x2000, scoped, tag = 'input window, operand 1, single buffered']
    #allocation3 [shape = 's32[2]{0}', space=sflag, size = 0x8, scoped, tag = 'scoped memory for _lambda_.1']
    #allocation4 [shape = 'u8[32768]{0}', space=vmem, size = 0x8000, scoped, tag = 'input window, operand 5, single buffered']
    #allocation5 [shape = 's32[1]{0}', space=sflag, size = 0x4, scoped, tag = 'scoped memory for _lambda_.1']
    #allocation6 [shape = 'u8[16384]{0}', space=vmem, size = 0x4000, scoped, tag = 'output window, operand 0']
    %12 = vsyncpa [#allocation3], 0
    %13 = vsyncpa [#allocation5], 0
    loop: start=0, step=1, limit=4
    $region2: #{_lambda_.1} parent=1 // loop_pre_header
      _
    $region3: #{_lambda_.1} parent=1 // loop_header
      %s15 = sphi 0, %s19
      %p16 = scmp.ge.s32.totalorder %s15, 4
      %s25 = sphi 0, %s27
      %s28 = sphi 0, %s25
      %s29 = sphi 0, %s28
      %s45 = sphi 0, %s29
      %s49 = sphi 0, %s49
      %s51 = sphi 0, %s49
      %s52 = sphi 0, %s51
      %s66 = sphi 0, %s52
      %s70 = sphi 0, %s70
      %s72 = sphi 0, %s70
      %s73 = sphi 0, %s72
      %s87 = sphi 0, %s73
      %s91 = sphi 0, %s91
      %s93 = sphi 0, %s91
      %s94 = sphi 0, %s93
      %s108 = sphi 0, %s94
      %s112 = sphi 0, %s112
      %s114 = sphi 0, %s112
      %s115 = sphi 0, %s114
      %s129 = sphi 0, %s115
      %s133 = sphi 0, %s133
      %s135 = sphi 0, %s133
      %s136 = sphi 0, %s135
      %s150 = sphi 0, %s136
      %s154 = sphi 0, %s154
      %s156 = sphi 0, %s154
      %s157 = sphi 0, %s156
      %s171 = sphi 0, %s157
      %s177 = sphi 0, %s179
      %s180 = sphi 0, %s177
      %s181 = sphi 0, %s180
      %s197 = sphi 0, %s181
    $region4: #{_lambda_.1} parent=1 // loop_header_branch
      %18 = sbr.rel (%p16) target = $region8
    $region5: #{_lambda_.1} parent=1 // loop_body
      %s20 = ssub.s32 %s15, 1
      %s21 = ssub.s32 %s15, 2
      %s22 = sadd.s32 %s15, 1
      %s23 = ssub.s32 %s15, %s22
      %p24 = scmp.eq.s32.totalorder %s23, 0
      %s26 = sadd.s32 %s25, 1
      %s27 = scalar_select %p24, %s25, %s26
      %p30 = pneg %p24
      %p31 = scmp.eq.s32.totalorder %s15, 1
      %p32 = por %p30, %p31
      %p33 = scmp.ne.s32.totalorder %s25, %s28
      %p34 = scmp.eq.s32.totalorder %s15, 0
      %p35 = por %p33, %p34
      %p36 = scmp.ne.s32.totalorder %s25, %s28
      %p37 = scmp.eq.s32.totalorder %s20, 1
      %p38 = por %p36, %p37
      %p39 = scmp.ne.s32.totalorder %s28, %s29
      %p40 = scmp.eq.s32.totalorder %s20, 0
      %p41 = por %p39, %p40
      %p42 = scmp.ne.s32.totalorder %s28, %s29
      %p43 = scmp.eq.s32.totalorder %s21, 1
      %p44 = por %p42, %p43
      %p46 = scmp.ne.s32.totalorder %s29, %s45
      %p47 = scmp.eq.s32.totalorder %s21, 0
      %p48 = por %p46, %p47
      %s50 = sadd.s32 %s49, 1
      %p53 = scmp.eq.s32.totalorder %s15, 1
      %p54 = scmp.ne.s32.totalorder %s49, %s51
      %p55 = scmp.eq.s32.totalorder %s15, 0
      %p56 = por %p54, %p55
      %p57 = scmp.ne.s32.totalorder %s49, %s51
      %p58 = scmp.eq.s32.totalorder %s20, 1
      %p59 = por %p57, %p58
      %p60 = scmp.ne.s32.totalorder %s51, %s52
      %p61 = scmp.eq.s32.totalorder %s20, 0
      %p62 = por %p60, %p61
      %p63 = scmp.ne.s32.totalorder %s51, %s52
      %p64 = scmp.eq.s32.totalorder %s21, 1
      %p65 = por %p63, %p64
      %p67 = scmp.ne.s32.totalorder %s52, %s66
      %p68 = scmp.eq.s32.totalorder %s21, 0
      %p69 = por %p67, %p68
      %s71 = sadd.s32 %s70, 1
      %p74 = scmp.eq.s32.totalorder %s15, 1
      %p75 = scmp.ne.s32.totalorder %s70, %s72
      %p76 = scmp.eq.s32.totalorder %s15, 0
      %p77 = por %p75, %p76
      %p78 = scmp.ne.s32.totalorder %s70, %s72
      %p79 = scmp.eq.s32.totalorder %s20, 1
      %p80 = por %p78, %p79
      %p81 = scmp.ne.s32.totalorder %s72, %s73
      %p82 = scmp.eq.s32.totalorder %s20, 0
      %p83 = por %p81, %p82
      %p84 = scmp.ne.s32.totalorder %s72, %s73
      %p85 = scmp.eq.s32.totalorder %s21, 1
      %p86 = por %p84, %p85
      %p88 = scmp.ne.s32.totalorder %s73, %s87
      %p89 = scmp.eq.s32.totalorder %s21, 0
      %p90 = por %p88, %p89
      %s92 = sadd.s32 %s91, 1
      %p95 = scmp.eq.s32.totalorder %s15, 1
      %p96 = scmp.ne.s32.totalorder %s91, %s93
      %p97 = scmp.eq.s32.totalorder %s15, 0
      %p98 = por %p96, %p97
      %p99 = scmp.ne.s32.totalorder %s91, %s93
      %p100 = scmp.eq.s32.totalorder %s20, 1
      %p101 = por %p99, %p100
      %p102 = scmp.ne.s32.totalorder %s93, %s94
      %p103 = scmp.eq.s32.totalorder %s20, 0
      %p104 = por %p102, %p103
      %p105 = scmp.ne.s32.totalorder %s93, %s94
      %p106 = scmp.eq.s32.totalorder %s21, 1
      %p107 = por %p105, %p106
      %p109 = scmp.ne.s32.totalorder %s94, %s108
      %p110 = scmp.eq.s32.totalorder %s21, 0
      %p111 = por %p109, %p110
      %s113 = sadd.s32 %s112, 1
      %p116 = scmp.eq.s32.totalorder %s15, 1
      %p117 = scmp.ne.s32.totalorder %s112, %s114
      %p118 = scmp.eq.s32.totalorder %s15, 0
      %p119 = por %p117, %p118
      %p120 = scmp.ne.s32.totalorder %s112, %s114
      %p121 = scmp.eq.s32.totalorder %s20, 1
      %p122 = por %p120, %p121
      %p123 = scmp.ne.s32.totalorder %s114, %s115
      %p124 = scmp.eq.s32.totalorder %s20, 0
      %p125 = por %p123, %p124
      %p126 = scmp.ne.s32.totalorder %s114, %s115
      %p127 = scmp.eq.s32.totalorder %s21, 1
      %p128 = por %p126, %p127
      %p130 = scmp.ne.s32.totalorder %s115, %s129
      %p131 = scmp.eq.s32.totalorder %s21, 0
      %p132 = por %p130, %p131
      %s134 = sadd.s32 %s133, 1
      %p137 = scmp.eq.s32.totalorder %s15, 1
      %p138 = scmp.ne.s32.totalorder %s133, %s135
      %p139 = scmp.eq.s32.totalorder %s15, 0
      %p140 = por %p138, %p139
      %p141 = scmp.ne.s32.totalorder %s133, %s135
      %p142 = scmp.eq.s32.totalorder %s20, 1
      %p143 = por %p141, %p142
      %p144 = scmp.ne.s32.totalorder %s135, %s136
      %p145 = scmp.eq.s32.totalorder %s20, 0
      %p146 = por %p144, %p145
      %p147 = scmp.ne.s32.totalorder %s135, %s136
      %p148 = scmp.eq.s32.totalorder %s21, 1
      %p149 = por %p147, %p148
      %p151 = scmp.ne.s32.totalorder %s136, %s150
      %p152 = scmp.eq.s32.totalorder %s21, 0
      %p153 = por %p151, %p152
      %s155 = sadd.s32 %s154, 1
      %p158 = scmp.eq.s32.totalorder %s15, 1
      %p159 = scmp.ne.s32.totalorder %s154, %s156
      %p160 = scmp.eq.s32.totalorder %s15, 0
      %p161 = por %p159, %p160
      %p162 = scmp.ne.s32.totalorder %s154, %s156
      %p163 = scmp.eq.s32.totalorder %s20, 1
      %p164 = por %p162, %p163
      %p165 = scmp.ne.s32.totalorder %s156, %s157
      %p166 = scmp.eq.s32.totalorder %s20, 0
      %p167 = por %p165, %p166
      %p168 = scmp.ne.s32.totalorder %s156, %s157
      %p169 = scmp.eq.s32.totalorder %s21, 1
      %p170 = por %p168, %p169
      %p172 = scmp.ne.s32.totalorder %s157, %s171
      %p173 = scmp.eq.s32.totalorder %s21, 0
      %p174 = por %p172, %p173
      %s175 = ssub.s32 %s15, %s22
      %p176 = scmp.eq.s32.totalorder %s175, 0
      %s178 = sadd.s32 %s177, 1
      %s179 = scalar_select %p176, %s177, %s178
      %p182 = pneg %p176
      %p183 = scmp.eq.s32.totalorder %s15, 1
      %p184 = por %p182, %p183
      %p185 = scmp.ne.s32.totalorder %s177, %s180
      %p186 = scmp.eq.s32.totalorder %s15, 0
      %p187 = por %p185, %p186
      %p188 = scmp.ne.s32.totalorder %s177, %s180
      %p189 = scmp.eq.s32.totalorder %s20, 1
      %p190 = por %p188, %p189
      %p191 = scmp.ne.s32.totalorder %s180, %s181
      %p192 = scmp.eq.s32.totalorder %s20, 0
      %p193 = por %p191, %p192
      %p194 = scmp.ne.s32.totalorder %s180, %s181
      %p195 = scmp.eq.s32.totalorder %s21, 1
      %p196 = por %p194, %p195
      %p198 = scmp.ne.s32.totalorder %s181, %s197
      %p199 = scmp.eq.s32.totalorder %s21, 0
      %p200 = por %p198, %p199
      %p201 = scmp.le.s32.totalorder 1, %s15
      %p202 = scmp.lt.s32.totalorder %s15, 3
      %p203 = pnand %p201, %p202
      %p204 = pneg %p203
      // Predicated region
      $region9: #{_lambda_.1} parent=5 // pred_check
        _
      $region10: #{_lambda_.1} parent=5 // pred_check_branch
        %206 = sbr.rel (%p203) target = $region12
      $region11: #{_lambda_.1} parent=5 // pred_region
        %s207 = ssub.s32 %s15, 1
        // Predicated region
        $region13: #{_lambda_.1} parent=11 // pred_check
          %p208 = pneg %p62
        $region14: #{_lambda_.1} parent=11 // pred_check_branch
          %210 = sbr.rel (%p208) target = $region16
        $region15: #{_lambda_.1} parent=11 // pred_region
          %s212 = ssub.s32 256, 256
          %213 = vsyncadd [#allocation3], %s212
          %s214 = sshll.u32 [#allocation2], 4
          %s215 = int_to_ptr.vmem [resolvable:$true] %s214
          %220 = dma.hbm_to_vmem [thread:$0]  %s1, 256, %s215, [#allocation3], 64, 64, 4
        $region16: #{_lambda_.1} parent=11 // pred_fallthru
          _
        // Predicated region
        $region17: #{_lambda_.1} parent=11 // pred_check
          %p221 = pneg %p83
        $region18: #{_lambda_.1} parent=11 // pred_check_branch
          %223 = sbr.rel (%p221) target = $region20
        $region19: #{_lambda_.1} parent=11 // pred_region
          _
        $region20: #{_lambda_.1} parent=11 // pred_fallthru
          _
        // Predicated region
        $region21: #{_lambda_.1} parent=11 // pred_check
          %p224 = pneg %p104
        $region22: #{_lambda_.1} parent=11 // pred_check_branch
          %226 = sbr.rel (%p224) target = $region24
        $region23: #{_lambda_.1} parent=11 // pred_region
          _
        $region24: #{_lambda_.1} parent=11 // pred_fallthru
          _
        // Predicated region
        $region25: #{_lambda_.1} parent=11 // pred_check
          %p227 = pneg %p125
        $region26: #{_lambda_.1} parent=11 // pred_check_branch
          %229 = sbr.rel (%p227) target = $region28
        $region27: #{_lambda_.1} parent=11 // pred_region
          _
        $region28: #{_lambda_.1} parent=11 // pred_fallthru
          _
        // Predicated region
        $region29: #{_lambda_.1} parent=11 // pred_check
          %p230 = pneg %p146
        $region30: #{_lambda_.1} parent=11 // pred_check_branch
          %232 = sbr.rel (%p230) target = $region32
        $region31: #{_lambda_.1} parent=11 // pred_region
          %s234 = ssub.s32 1024, 1024
          %235 = vsyncadd [#allocation5], %s234
          %s236 = sshll.u32 [#allocation4], 4
          %s237 = int_to_ptr.vmem [resolvable:$true] %s236
          %242 = dma.hbm_to_vmem [thread:$0]  %s5, 1024, %s237, [#allocation5], 64, 64, 4
        $region32: #{_lambda_.1} parent=11 // pred_fallthru
          _
        // Predicated region
        $region33: #{_lambda_.1} parent=11 // pred_check
          %p243 = pneg %p167
        $region34: #{_lambda_.1} parent=11 // pred_check_branch
          %245 = sbr.rel (%p243) target = $region36
        $region35: #{_lambda_.1} parent=11 // pred_region
          _
        $region36: #{_lambda_.1} parent=11 // pred_fallthru
          _
      $region12: #{_lambda_.1} parent=5 // pred_fallthru
        _
      %p246 = scmp.lt.s32.totalorder %s15, 2
      // Predicated region
      $region37: #{_lambda_.1} parent=5 // pred_check
        %p247 = pneg %p246
      $region38: #{_lambda_.1} parent=5 // pred_check_branch
        %249 = sbr.rel (%p247) target = $region40
      $region39: #{_lambda_.1} parent=5 // pred_region
        // Predicated region
        $region41: #{_lambda_.1} parent=39 // pred_check
          %p250 = pneg %p35
        $region42: #{_lambda_.1} parent=39 // pred_check_branch
          %252 = sbr.rel (%p250) target = $region44
        $region43: #{_lambda_.1} parent=39 // pred_region
          %s253 = smul.u32 4, %s15
          %s254 = ssub.s32 5, %s253
          %p255 = scmp.lt.s32.totalorder %s254, 4
          %s256 = scalar_select %p255, %s254, 4
          %s257 = smul.u32 128, %s256
          %p258 = scmp.lt.s32.totalorder %s253, 4
          %s259 = scalar_select %p258, %s253, 4
          %s260 = smul.addr %s259, 8
          %s261 = scalar_lea.vmem %s0, %s260
          %s262 = smul.u32 4, %s15
          %s263 = ssub.s32 5, %s262
          %p264 = scmp.lt.s32.totalorder %s263, 4
          %s265 = scalar_select %p264, %s263, 4
          %s266 = smul.u32 128, %s265
        $region44: #{_lambda_.1} parent=39 // pred_fallthru
          _
      $region40: #{_lambda_.1} parent=5 // pred_fallthru
        _
      %p267 = scmp.le.s32.totalorder 1, %s15
      %p268 = scmp.lt.s32.totalorder %s15, 3
      %p269 = pnand %p267, %p268
      %p270 = pneg %p269
      // Predicated region
      $region45: #{_lambda_.1} parent=5 // pred_check
        _
      $region46: #{_lambda_.1} parent=5 // pred_check_branch
        %272 = sbr.rel (%p269) target = $region48
      $region47: #{_lambda_.1} parent=5 // pred_region
        %s273 = ssub.s32 %s15, 1
        // Predicated region
        $region49: #{_lambda_.1} parent=47 // pred_check
          %p274 = pneg %p62
        $region50: #{_lambda_.1} parent=47 // pred_check_branch
          %276 = sbr.rel (%p274) target = $region52
        $region51: #{_lambda_.1} parent=47 // pred_region
          %277 = dma.done [#allocation3], 256
        $region52: #{_lambda_.1} parent=47 // pred_fallthru
          _
        // Predicated region
        $region53: #{_lambda_.1} parent=47 // pred_check
          %p278 = pneg %p146
        $region54: #{_lambda_.1} parent=47 // pred_check_branch
          %280 = sbr.rel (%p278) target = $region56
        $region55: #{_lambda_.1} parent=47 // pred_region
          %281 = dma.done [#allocation5], 1024
        $region56: #{_lambda_.1} parent=47 // pred_fallthru
          _
        %s282 = smul.u32 4, %s20
        %s283 = ssub.s32 5, %s282
        %p284 = scmp.lt.s32.totalorder %s283, 4
        %s285 = scalar_select %p284, %s283, 4
        %s286 = smul.u32 128, %s285
        %p287 = scmp.lt.s32.totalorder %s282, 4
        %s288 = scalar_select %p287, %s282, 4
        %s289 = smul.addr %s288, 8
        %s290 = scalar_lea.vmem %s0, %s289
        %p291 = pneg %p41
        %p292 = pneg %p38
        %p293 = pneg %p62
        %p294 = pneg %p59
        %p295 = pneg %p83
        %p296 = pneg %p80
        %p297 = pneg %p104
        %p298 = pneg %p101
        %p299 = pneg %p125
        %p300 = pneg %p122
        %p301 = pneg %p146
        %p302 = pneg %p143
        %p303 = pneg %p167
        %p304 = pneg %p164
        %p305 = pneg %p193
        %p306 = pneg %p190
        %s307 = sand.u32 %s180, 1
        %s308 = sand.u32 %s180, 1
        %s309 = smul.addr %s308, 16
        %s310 = scalar_lea.vmem [#allocation6], %s309
        %s311 = smul.u32 4, %s20
        %s312 = ssub.s32 5, %s311
        %p313 = scmp.lt.s32.totalorder %s312, 4
        %s314 = scalar_select %p313, %s312, 4
        %s315 = smul.u32 128, %s314
        %p316 = scmp.lt.s32.totalorder %s311, 4
        %s317 = scalar_select %p316, %s311, 4
        %s318 = smul.addr %s317, 8
        %s319 = scalar_lea.vmem %s0, %s318
        %s320 = smul.u32 4, %s20
        %s321 = ssub.s32 5, %s320
        %p322 = scmp.lt.s32.totalorder %s321, 4
        %s323 = scalar_select %p322, %s321, 4
        %s324 = smul.u32 128, %s323
        %s325 = smul.u32 4, %s20
        %s326 = ssub.s32 5, %s325
        %p327 = scmp.lt.s32.totalorder %s326, 4
        %s328 = scalar_select %p327, %s326, 4
        %s329 = smul.u32 64, %s328
        %v331 = vld [vmem:[%s319] sm:$0xff]
        %v332 = vld [vmem:[%s319 + $0x8] sm:$0xff]
        %v333 = vld [vmem:[%s319 + $0x10] sm:$0xff]
        %v334 = vld [vmem:[%s319 + $0x18] sm:$0xff]
        %v335 = vpack.c.bf16 %v332, %v331
        %v336 = vpack.c.bf16 %v334, %v333
        %v337 = vld [vmem:[#allocation2] sm:$0xf]
        %v338 = vld [vmem:[#allocation2 + $0x4] sm:$0xf]
        %v339 = vld [vmem:[#allocation2 + $0x8] sm:$0xf]
        %v340 = vld [vmem:[#allocation2 + $0xc] sm:$0xf]
        %v341 = vld [vmem:[%s2] sm:$0x1]
        %v343 = vlaneseq
        %v344 = vshrl.u32 %v343, 7
        %v345 = vsub.s32 0, %v344
        %v346 = vrot.slane %v341, %v345
        %v352 = vunpack.c.l.b16 %v337
        %v353 = vunpack.c.l.b16 %v338
        %v354 = vunpack.c.l.b16 %v339
        %v355 = vunpack.c.l.b16 %v340
        %v356 = vpack.c.b16 %v353, %v352
        %v357 = vpack.c.b16 %v355, %v354
        %vm360 = vcmask 261120
        %v362 = vsel %vm360, %v335, 0
        %v365 = vsel %vm360, %v336, 0
        %367 = vmatprep.subr.bf16.mxu0 0
        %368 = vmatpush1.bf16.msra.mxu0 0
        %369 = vmatprep.subr.bf16.mxu0 0
        %370 = vmatpush1.bf16.msra.mxu0 0
        %371 = vmatprep.subr.bf16.mxu0 0
        %372 = vmatpush1.bf16.msra.mxu0 0
        %373 = vmatprep.subr.bf16.mxu0 0
        %374 = vmatpush1.bf16.msra.mxu0 0
        %375 = vmatprep.subr.bf16.mxu0 0
        %376 = vmatpush1.bf16.msra.mxu0 0
        %377 = vmatprep.subr.bf16.mxu0 0
        %378 = vmatpush1.bf16.msra.mxu0 0
        %379 = vmatprep.subr.bf16.mxu0 0
        %380 = vmatpush1.bf16.msra.mxu0 %v357
        %381 = vmatprep.subr.bf16.mxu0 0
        %382 = vmatpush1.bf16.msra.mxu0 %v356
        %383 = vmatprep.subr.bf16.mxu0 0
        %384 = vmatpush2.bf16.msra.mxu0 0
        %385 = vmatprep.subr.bf16.mxu0 0
        %386 = vmatpush2.bf16.msra.mxu0 0
        %387 = vmatprep.subr.bf16.mxu0 0
        %388 = vmatpush2.bf16.msra.mxu0 0
        %389 = vmatprep.subr.bf16.mxu0 0
        %390 = vmatpush2.bf16.msra.mxu0 0
        %391 = vmatprep.subr.bf16.mxu0 0
        %392 = vmatpush2.bf16.msra.mxu0 0
        %393 = vmatprep.subr.bf16.mxu0 0
        %394 = vmatpush2.bf16.msra.mxu0 0
        %395 = vmatprep.subr.bf16.mxu0 0
        %396 = vmatpush2.bf16.msra.mxu0 0
        %397 = vmatprep.subr.bf16.mxu0 0
        %398 = vmatpush2.bf16.msra.mxu0 0
        %399 = vmatprep.mubr.bf16.mxu0 0
        %400 = vmatmul.mubr.bf16.gmra.mxu0 %v362
        %v401 = vpop.f32.mrf.mxu0
        %v402 = vadd.f32 %v346, %v401
        %v403 = vpop.f32.mrf.mxu0
        %v404 = vpop.f32.mrf.mxu0
        %v405 = vadd.f32 %v346, %v404
        %v406 = vpop.f32.mrf.mxu0
        %407 = vmatprep.mubr.bf16.mxu0 0
        %408 = vmatmul.mubr.bf16.gmra.mxu0 %v365
        %v409 = vpop.f32.mrf.mxu0
        %v410 = vadd.f32 %v346, %v409
        %v411 = vpop.f32.mrf.mxu0
        %v412 = vpop.f32.mrf.mxu0
        %v413 = vadd.f32 %v346, %v412
        %v414 = vpop.f32.mrf.mxu0
        %415 = vdwg.mxu0
        %v416 = vmax.f32 %v402, 0.0
        %v417 = vmax.f32 %v405, 0.0
        %v418 = vmax.f32 %v410, 0.0
        %v419 = vmax.f32 %v413, 0.0
        %v420 = vpack.c.bf16 %v417, %v416
        %v421 = vpack.c.bf16 %v419, %v418
        %v422 = vld [vmem:[%s3] sm:$0xf]
        %v423 = vld [vmem:[%s3 + $0x4] sm:$0xf]
        %v424 = vld [vmem:[%s3 + $0x8] sm:$0xf]
        %v425 = vld [vmem:[%s3 + $0xc] sm:$0xf]
        %v426 = vld [vmem:[%s3 + $0x10] sm:$0xf]
        %v427 = vld [vmem:[%s3 + $0x14] sm:$0xf]
        %v428 = vld [vmem:[%s3 + $0x18] sm:$0xf]
        %v429 = vld [vmem:[%s3 + $0x1c] sm:$0xf]
        %v430 = vld [vmem:[%s3 + $0x20] sm:$0xf]
        %v431 = vld [vmem:[%s3 + $0x24] sm:$0xf]
        %v432 = vld [vmem:[%s3 + $0x28] sm:$0xf]
        %v433 = vld [vmem:[%s3 + $0x2c] sm:$0xf]
        %v434 = vld [vmem:[%s3 + $0x30] sm:$0xf]
        %v435 = vld [vmem:[%s3 + $0x34] sm:$0xf]
        %v436 = vld [vmem:[%s3 + $0x38] sm:$0xf]
        %v437 = vld [vmem:[%s3 + $0x3c] sm:$0xf]
        %v438 = vld [vmem:[%s4] sm:$0x1]
        %v440 = vlaneseq
        %v441 = vshrl.u32 %v440, 7
        %v442 = vsub.s32 0, %v441
        %v443 = vrot.slane %v438, %v442
        %v461 = vunpack.c.l.b16 %v422
        %v462 = vunpack.c.l.b16 %v423
        %v463 = vunpack.c.l.b16 %v424
        %v464 = vunpack.c.l.b16 %v425
        %v465 = vunpack.c.l.b16 %v426
        %v466 = vunpack.c.l.b16 %v427
        %v467 = vunpack.c.l.b16 %v428
        %v468 = vunpack.c.l.b16 %v429
        %v469 = vunpack.c.l.b16 %v430
        %v470 = vunpack.c.l.b16 %v431
        %v471 = vunpack.c.l.b16 %v432
        %v472 = vunpack.c.l.b16 %v433
        %v473 = vunpack.c.l.b16 %v434
        %v474 = vunpack.c.l.b16 %v435
        %v475 = vunpack.c.l.b16 %v436
        %v476 = vunpack.c.l.b16 %v437
        %v477 = vpack.c.b16 %v462, %v461
        %v478 = vpack.c.b16 %v464, %v463
        %v479 = vpack.c.b16 %v466, %v465
        %v480 = vpack.c.b16 %v468, %v467
        %v481 = vpack.c.b16 %v470, %v469
        %v482 = vpack.c.b16 %v472, %v471
        %v483 = vpack.c.b16 %v474, %v473
        %v484 = vpack.c.b16 %v476, %v475
        %493 = vmatprep.subr.bf16.mxu0 0
        %494 = vmatpush1.bf16.msra.mxu0 %v484
        %495 = vmatprep.subr.bf16.mxu0 0
        %496 = vmatpush1.bf16.msra.mxu0 %v483
        %497 = vmatprep.subr.bf16.mxu0 0
        %498 = vmatpush1.bf16.msra.mxu0 %v482
        %499 = vmatprep.subr.bf16.mxu0 0
        %500 = vmatpush1.bf16.msra.mxu0 %v481
        %501 = vmatprep.subr.bf16.mxu0 0
        %502 = vmatpush1.bf16.msra.mxu0 %v480
        %503 = vmatprep.subr.bf16.mxu0 0
        %504 = vmatpush1.bf16.msra.mxu0 %v479
        %505 = vmatprep.subr.bf16.mxu0 0
        %506 = vmatpush1.bf16.msra.mxu0 %v478
        %507 = vmatprep.subr.bf16.mxu0 0
        %508 = vmatpush1.bf16.msra.mxu0 %v477
        %509 = vmatprep.subr.bf16.mxu0 0
        %510 = vmatpush2.bf16.msra.mxu0 0
        %511 = vmatprep.subr.bf16.mxu0 0
        %512 = vmatpush2.bf16.msra.mxu0 0
        %513 = vmatprep.subr.bf16.mxu0 0
        %514 = vmatpush2.bf16.msra.mxu0 0
        %515 = vmatprep.subr.bf16.mxu0 0
        %516 = vmatpush2.bf16.msra.mxu0 0
        %517 = vmatprep.subr.bf16.mxu0 0
        %518 = vmatpush2.bf16.msra.mxu0 0
        %519 = vmatprep.subr.bf16.mxu0 0
        %520 = vmatpush2.bf16.msra.mxu0 0
        %521 = vmatprep.subr.bf16.mxu0 0
        %522 = vmatpush2.bf16.msra.mxu0 0
        %523 = vmatprep.subr.bf16.mxu0 0
        %524 = vmatpush2.bf16.msra.mxu0 0
        %525 = vmatprep.mubr.bf16.mxu0 0
        %526 = vmatmul.mubr.bf16.gmra.mxu0 %v420
        %v527 = vpop.f32.mrf.mxu0
        %v528 = vadd.f32 %v443, %v527
        %v529 = vpop.f32.mrf.mxu0
        %v530 = vpop.f32.mrf.mxu0
        %v531 = vadd.f32 %v443, %v530
        %v532 = vpop.f32.mrf.mxu0
        %533 = vmatprep.mubr.bf16.mxu0 0
        %534 = vmatmul.mubr.bf16.gmra.mxu0 %v421
        %v535 = vpop.f32.mrf.mxu0
        %v536 = vadd.f32 %v443, %v535
        %v537 = vpop.f32.mrf.mxu0
        %v538 = vpop.f32.mrf.mxu0
        %v539 = vadd.f32 %v443, %v538
        %v540 = vpop.f32.mrf.mxu0
        %541 = vdwg.mxu0
        %v542 = vmax.f32 %v528, 0.0
        %v543 = vmax.f32 %v531, 0.0
        %v544 = vmax.f32 %v536, 0.0
        %v545 = vmax.f32 %v539, 0.0
        %v546 = vpack.c.bf16 %v543, %v542
        %v547 = vpack.c.bf16 %v545, %v544
        %v548 = vld [vmem:[#allocation4] sm:$0xf]
        %v549 = vld [vmem:[#allocation4 + $0x4] sm:$0xf]
        %v550 = vld [vmem:[#allocation4 + $0x8] sm:$0xf]
        %v551 = vld [vmem:[#allocation4 + $0xc] sm:$0xf]
        %v552 = vld [vmem:[#allocation4 + $0x10] sm:$0xf]
        %v553 = vld [vmem:[#allocation4 + $0x14] sm:$0xf]
        %v554 = vld [vmem:[#allocation4 + $0x18] sm:$0xf]
        %v555 = vld [vmem:[#allocation4 + $0x1c] sm:$0xf]
        %v556 = vld [vmem:[#allocation4 + $0x20] sm:$0xf]
        %v557 = vld [vmem:[#allocation4 + $0x24] sm:$0xf]
        %v558 = vld [vmem:[#allocation4 + $0x28] sm:$0xf]
        %v559 = vld [vmem:[#allocation4 + $0x2c] sm:$0xf]
        %v560 = vld [vmem:[#allocation4 + $0x30] sm:$0xf]
        %v561 = vld [vmem:[#allocation4 + $0x34] sm:$0xf]
        %v562 = vld [vmem:[#allocation4 + $0x38] sm:$0xf]
        %v563 = vld [vmem:[#allocation4 + $0x3c] sm:$0xf]
        %v564 = vld [vmem:[%s6] sm:$0x1]
        %v566 = vlaneseq
        %v567 = vshrl.u32 %v566, 7
        %v568 = vsub.s32 0, %v567
        %v569 = vrot.slane %v564, %v568
        %v587 = vunpack.c.l.b16 %v548
        %v588 = vunpack.c.l.b16 %v549
        %v589 = vunpack.c.l.b16 %v550
        %v590 = vunpack.c.l.b16 %v551
        %v591 = vunpack.c.l.b16 %v552
        %v592 = vunpack.c.l.b16 %v553
        %v593 = vunpack.c.l.b16 %v554
        %v594 = vunpack.c.l.b16 %v555
        %v595 = vunpack.c.l.b16 %v556
        %v596 = vunpack.c.l.b16 %v557
        %v597 = vunpack.c.l.b16 %v558
        %v598 = vunpack.c.l.b16 %v559
        %v599 = vunpack.c.l.b16 %v560
        %v600 = vunpack.c.l.b16 %v561
        %v601 = vunpack.c.l.b16 %v562
        %v602 = vunpack.c.l.b16 %v563
        %v603 = vpack.c.b16 %v588, %v587
        %v604 = vpack.c.b16 %v590, %v589
        %v605 = vpack.c.b16 %v592, %v591
        %v606 = vpack.c.b16 %v594, %v593
        %v607 = vpack.c.b16 %v596, %v595
        %v608 = vpack.c.b16 %v598, %v597
        %v609 = vpack.c.b16 %v600, %v599
        %v610 = vpack.c.b16 %v602, %v601
        %619 = vmatprep.subr.bf16.mxu0 0
        %620 = vmatpush1.bf16.msra.mxu0 %v610
        %621 = vmatprep.subr.bf16.mxu0 0
        %622 = vmatpush1.bf16.msra.mxu0 %v609
        %623 = vmatprep.subr.bf16.mxu0 0
        %624 = vmatpush1.bf16.msra.mxu0 %v608
        %625 = vmatprep.subr.bf16.mxu0 0
        %626 = vmatpush1.bf16.msra.mxu0 %v607
        %627 = vmatprep.subr.bf16.mxu0 0
        %628 = vmatpush1.bf16.msra.mxu0 %v606
        %629 = vmatprep.subr.bf16.mxu0 0
        %630 = vmatpush1.bf16.msra.mxu0 %v605
        %631 = vmatprep.subr.bf16.mxu0 0
        %632 = vmatpush1.bf16.msra.mxu0 %v604
        %633 = vmatprep.subr.bf16.mxu0 0
        %634 = vmatpush1.bf16.msra.mxu0 %v603
        %635 = vmatprep.subr.bf16.mxu0 0
        %636 = vmatpush2.bf16.msra.mxu0 0
        %637 = vmatprep.subr.bf16.mxu0 0
        %638 = vmatpush2.bf16.msra.mxu0 0
        %639 = vmatprep.subr.bf16.mxu0 0
        %640 = vmatpush2.bf16.msra.mxu0 0
        %641 = vmatprep.subr.bf16.mxu0 0
        %642 = vmatpush2.bf16.msra.mxu0 0
        %643 = vmatprep.subr.bf16.mxu0 0
        %644 = vmatpush2.bf16.msra.mxu0 0
        %645 = vmatprep.subr.bf16.mxu0 0
        %646 = vmatpush2.bf16.msra.mxu0 0
        %647 = vmatprep.subr.bf16.mxu0 0
        %648 = vmatpush2.bf16.msra.mxu0 0
        %649 = vmatprep.subr.bf16.mxu0 0
        %650 = vmatpush2.bf16.msra.mxu0 0
        %651 = vmatprep.mubr.bf16.mxu0 0
        %652 = vmatmul.mubr.bf16.gmra.mxu0 %v546
        %v653 = vpop.f32.mrf.mxu0
        %v654 = vadd.f32 %v569, %v653
        %v655 = vpop.f32.mrf.mxu0
        %v656 = vpop.f32.mrf.mxu0
        %v657 = vadd.f32 %v569, %v656
        %v658 = vpop.f32.mrf.mxu0
        %659 = vmatprep.mubr.bf16.mxu0 0
        %660 = vmatmul.mubr.bf16.gmra.mxu0 %v547
        %v661 = vpop.f32.mrf.mxu0
        %v662 = vadd.f32 %v569, %v661
        %v663 = vpop.f32.mrf.mxu0
        %v664 = vpop.f32.mrf.mxu0
        %v665 = vadd.f32 %v569, %v664
        %v666 = vpop.f32.mrf.mxu0
        %667 = vdwg.mxu0
        %v668 = vmax.f32 %v654, 0.0
        %v669 = vmax.f32 %v657, 0.0
        %v670 = vmax.f32 %v662, 0.0
        %v671 = vmax.f32 %v665, 0.0
        %v672 = vpack.c.bf16 %v669, %v668
        %v673 = vpack.c.bf16 %v671, %v670
        %v676 = vunpack.c.l.b16 %v672
        %v677 = vunpack.c.h.b16 %v672
        %v678 = vunpack.c.l.b16 %v673
        %v679 = vunpack.c.h.b16 %v673
        %v680 = vpack.c.b16 %v676, %v676
        %v681 = vpack.c.b16 %v677, %v677
        %v682 = vpack.c.b16 %v678, %v678
        %v683 = vpack.c.b16 %v679, %v679
        %688 = vst [vmem:[%s310] sm:$0xf] %v680
        %689 = vst [vmem:[%s310 + $0x4] sm:$0xf] %v681
        %690 = vst [vmem:[%s310 + $0x8] sm:$0xf] %v682
        %691 = vst [vmem:[%s310 + $0xc] sm:$0xf] %v683
        %s692 = sand.u32 %s180, 1
        %s693 = sand.u32 %s180, 1
        %s694 = smul.addr %s693, 16
        %s695 = scalar_lea.vmem [#allocation6], %s694
        // Predicated region
        $region57: #{_lambda_.1} parent=47 // pred_check
          %p696 = pneg %p190
        $region58: #{_lambda_.1} parent=47 // pred_check_branch
          %698 = sbr.rel (%p696) target = $region60
        $region59: #{_lambda_.1} parent=47 // pred_region
          %s699 = smul.u32 4, %s20
          %s700 = ssub.s32 5, %s699
          %p701 = scmp.lt.s32.totalorder %s700, 4
          %s702 = scalar_select %p701, %s700, 4
          %s703 = smul.u32 64, %s702
          %p704 = scmp.ne.s32.totalorder 0, %s703
          %s705 = smul.addr %s699, 4
          %s706 = scalar_lea.vmem %s7, %s705
          // Predicated region
          $region61: #{_lambda_.1} parent=59 // pred_check
            %p707 = pneg %p704
          $region62: #{_lambda_.1} parent=59 // pred_check_branch
            %709 = sbr.rel (%p707) target = $region64
          $region63: #{_lambda_.1} parent=59 // pred_region
            // Predicated region
            $region65: #{_lambda_.1} parent=63 // pred_check
              _
            $region66: #{_lambda_.1} parent=63 // pred_check_branch
              %711 = sbr.rel target = $region68
            $region67: #{_lambda_.1} parent=63 // pred_region
              // Predicated region
              $region87: #{_lambda_.1} parent=67 // pred_check
                _
              $region88: #{_lambda_.1} parent=67 // pred_check_branch
                %767 = sbr.rel (0) target = $region90
              $region89: #{_lambda_.1} parent=67 // pred_region
                %s769 = ssub.s32 16, 1
                %s770 = sshrl.u32 %s702, 2
                // While loop
                $region91: #{_lambda_.1} parent=89 // loop_pre_header
                  _
                $region92: #{_lambda_.1} parent=89 // loop_header
                  %s772 = sphi 0, %s774
                  %p773 = scmp.ge.s32.totalorder %s772, %s770
                  %s777 = sphi 0, %s790
                  %s778 = sphi %s695, %s793
                  %s779 = sphi %s706, %s794
                $region93: #{_lambda_.1} parent=89 // loop_header_branch
                  %776 = sbr.rel (%p773) target = $region97
                $region94: #{_lambda_.1} parent=89 // loop_body
                  %v780 = vld [vmem:[%s778] sm:%s769]
                  %781 = vst [vmem:[%s779] sm:%s769] %v780
                  %v782 = vld [vmem:[%s778 + $0x4] sm:%s769]
                  %783 = vst [vmem:[%s779 + $0x4] sm:%s769] %v782
                  %v784 = vld [vmem:[%s778 + $0x8] sm:%s769]
                  %785 = vst [vmem:[%s779 + $0x8] sm:%s769] %v784
                  %v786 = vld [vmem:[%s778 + $0xc] sm:%s769]
                  %787 = vst [vmem:[%s779 + $0xc] sm:%s769] %v786
                  %s788 = sadd.s32 1, %s777
                  %p789 = scmp.ge.s32.totalorder %s788, %s770
                  %s790 = scalar_select %p789, 0, %s788
                  %s791 = smul.u32 %s790, 16
                  %s792 = smul.u32 %s790, 16
                  %s793 = scalar_lea.vmem %s695, %s791 [#allocation6]
                  %s794 = scalar_lea.vmem %s706, %s792
                $region95: #{_lambda_.1} parent=89 // loop_footer
                  %s774 = sadd.s32 %s772, 1
                $region96: #{_lambda_.1} parent=89 // loop_footer_branch
                  %771 = sbr.rel target = $region92
                $region97: #{_lambda_.1} parent=89 // loop_exit
                  _
                %s795 = sshrl.u32 %s702, 2
                %s796 = sand.u32 %s702, 3
                %s797 = smul.u32 %s795, 4
                %s798 = smul.u32 4, %s797
                %s799 = scalar_lea.vmem %s695, %s798 [#allocation6]
                %s800 = smul.u32 4, %s797
                %s801 = scalar_lea.vmem %s706, %s800
                // While loop
                $region98: #{_lambda_.1} parent=89 // loop_pre_header
                  _
                $region99: #{_lambda_.1} parent=89 // loop_header
                  %s803 = sphi 0, %s805
                  %p804 = scmp.ge.s32.totalorder %s803, %s796
                  %s808 = sphi 0, %s815
                  %s809 = sphi %s799, %s818
                  %s810 = sphi %s801, %s819
                $region100: #{_lambda_.1} parent=89 // loop_header_branch
                  %807 = sbr.rel (%p804) target = $region104
                $region101: #{_lambda_.1} parent=89 // loop_body
                  %v811 = vld [vmem:[%s809] sm:%s769]
                  %812 = vst [vmem:[%s810] sm:%s769] %v811
                  %s813 = sadd.s32 1, %s808
                  %p814 = scmp.ge.s32.totalorder %s813, %s796
                  %s815 = scalar_select %p814, 0, %s813
                  %s816 = smul.u32 %s815, 4
                  %s817 = smul.u32 %s815, 4
                  %s818 = scalar_lea.vmem %s799, %s816 [#allocation6]
                  %s819 = scalar_lea.vmem %s801, %s817
                $region102: #{_lambda_.1} parent=89 // loop_footer
                  %s805 = sadd.s32 %s803, 1
                $region103: #{_lambda_.1} parent=89 // loop_footer_branch
                  %802 = sbr.rel target = $region99
                $region104: #{_lambda_.1} parent=89 // loop_exit
                  _
              $region90: #{_lambda_.1} parent=67 // pred_fallthru
                _
            $region68: #{_lambda_.1} parent=63 // pred_fallthru
              _
            // Predicated region
            $region69: #{_lambda_.1} parent=63 // pred_check
              _
            $region70: #{_lambda_.1} parent=63 // pred_check_branch
              %713 = sbr.rel (0) target = $region72
            $region71: #{_lambda_.1} parent=63 // pred_region
              %s715 = ssub.s32 16, 1
              %s716 = sshrl.u32 %s702, 2
              // While loop
              $region73: #{_lambda_.1} parent=71 // loop_pre_header
                _
              $region74: #{_lambda_.1} parent=71 // loop_header
                %s718 = sphi 0, %s720
                %p719 = scmp.ge.s32.totalorder %s718, %s716
                %s723 = sphi 0, %s736
                %s724 = sphi %s695, %s739
                %s725 = sphi %s706, %s740
              $region75: #{_lambda_.1} parent=71 // loop_header_branch
                %722 = sbr.rel (%p719) target = $region79
              $region76: #{_lambda_.1} parent=71 // loop_body
                %v726 = vld [vmem:[%s724] sm:%s715]
                %727 = vst [vmem:[%s725] sm:%s715] %v726
                %v728 = vld [vmem:[%s724 + $0x4] sm:%s715]
                %729 = vst [vmem:[%s725 + $0x4] sm:%s715] %v728
                %v730 = vld [vmem:[%s724 + $0x8] sm:%s715]
                %731 = vst [vmem:[%s725 + $0x8] sm:%s715] %v730
                %v732 = vld [vmem:[%s724 + $0xc] sm:%s715]
                %733 = vst [vmem:[%s725 + $0xc] sm:%s715] %v732
                %s734 = sadd.s32 1, %s723
                %p735 = scmp.ge.s32.totalorder %s734, %s716
                %s736 = scalar_select %p735, 0, %s734
                %s737 = smul.u32 %s736, 16
                %s738 = smul.u32 %s736, 16
                %s739 = scalar_lea.vmem %s695, %s737 [#allocation6]
                %s740 = scalar_lea.vmem %s706, %s738
              $region77: #{_lambda_.1} parent=71 // loop_footer
                %s720 = sadd.s32 %s718, 1
              $region78: #{_lambda_.1} parent=71 // loop_footer_branch
                %717 = sbr.rel target = $region74
              $region79: #{_lambda_.1} parent=71 // loop_exit
                _
              %s741 = sshrl.u32 %s702, 2
              %s742 = sand.u32 %s702, 3
              %s743 = smul.u32 %s741, 4
              %s744 = smul.u32 4, %s743
              %s745 = scalar_lea.vmem %s695, %s744 [#allocation6]
              %s746 = smul.u32 4, %s743
              %s747 = scalar_lea.vmem %s706, %s746
              // While loop
              $region80: #{_lambda_.1} parent=71 // loop_pre_header
                _
              $region81: #{_lambda_.1} parent=71 // loop_header
                %s749 = sphi 0, %s751
                %p750 = scmp.ge.s32.totalorder %s749, %s742
                %s754 = sphi 0, %s761
                %s755 = sphi %s745, %s764
                %s756 = sphi %s747, %s765
              $region82: #{_lambda_.1} parent=71 // loop_header_branch
                %753 = sbr.rel (%p750) target = $region86
              $region83: #{_lambda_.1} parent=71 // loop_body
                %v757 = vld [vmem:[%s755] sm:%s715]
                %758 = vst [vmem:[%s756] sm:%s715] %v757
                %s759 = sadd.s32 1, %s754
                %p760 = scmp.ge.s32.totalorder %s759, %s742
                %s761 = scalar_select %p760, 0, %s759
                %s762 = smul.u32 %s761, 4
                %s763 = smul.u32 %s761, 4
                %s764 = scalar_lea.vmem %s745, %s762 [#allocation6]
                %s765 = scalar_lea.vmem %s747, %s763
              $region84: #{_lambda_.1} parent=71 // loop_footer
                %s751 = sadd.s32 %s749, 1
              $region85: #{_lambda_.1} parent=71 // loop_footer_branch
                %748 = sbr.rel target = $region81
              $region86: #{_lambda_.1} parent=71 // loop_exit
                _
            $region72: #{_lambda_.1} parent=63 // pred_fallthru
              _
          $region64: #{_lambda_.1} parent=59 // pred_fallthru
            _
          %820 = vnop
        $region60: #{_lambda_.1} parent=47 // pred_fallthru
          _
      $region48: #{_lambda_.1} parent=5 // pred_fallthru
        _
      %p821 = scmp.le.s32.totalorder 2, %s15
      // Predicated region
      $region105: #{_lambda_.1} parent=5 // pred_check
        %p822 = pneg %p821
      $region106: #{_lambda_.1} parent=5 // pred_check_branch
        %824 = sbr.rel (%p822) target = $region108
      $region107: #{_lambda_.1} parent=5 // pred_region
        %s825 = ssub.s32 %s15, 2
        // Predicated region
        $region109: #{_lambda_.1} parent=107 // pred_check
          %p826 = pneg %p196
        $region110: #{_lambda_.1} parent=107 // pred_check_branch
          %828 = sbr.rel (%p826) target = $region112
        $region111: #{_lambda_.1} parent=107 // pred_region
          %s829 = sand.u32 %s181, 1
          %s830 = sand.u32 %s181, 1
          %s831 = smul.addr %s830, 16
          %s832 = scalar_lea.vmem [#allocation6], %s831
        $region112: #{_lambda_.1} parent=107 // pred_fallthru
          _
      $region108: #{_lambda_.1} parent=5 // pred_fallthru
        _
    $region6: #{_lambda_.1} parent=1 // loop_footer
      %s19 = sadd.s32 1, %s15
    $region7: #{_lambda_.1} parent=1 // loop_footer_branch
      %14 = sbr.rel target = $region3
    $region8: #{_lambda_.1} parent=1 // loop_exit
      _
    %833 = vsyncpa [#allocation3], 1
    %s834 = scalar_lea.sflag [#allocation3], 1
    %835 = vsyncpa %s834, 1
    %836 = vsyncpa [#allocation5], 1

</llo_original>
